<compile_context>
chip_gen: v5e
topology: v5e:2x2
jax: 0.10.0
libtpu: 0.0.40
codegen_flags: <defaults>
</compile_context>

<pallas_src>
import functools

import jax
import jax.numpy as jnp
from jax.experimental import pallas as pl
from jax.experimental.pallas import tpu as pltpu

N_EMBD = 64
HIDDEN = 2 * N_EMBD              # 128
DROPOUT_P = 0.2
ROW_TILE = 512                   # logical rows per grid step (multiple of 16)

_D2 = 2 * N_EMBD                 # 128  (lane-dense activation width)
_H2 = 2 * HIDDEN                 # 256  (block-diagonal hidden width)
# 31-bit integer dropout threshold: drop iff bits < p * 2^31
_DROP_THRESH_31 = int(DROPOUT_P * (1 << 31))


def _ffn_kernel(x_ref, w1_ref, b1_ref, w2_ref, b2_ref, w3_ref, b3_ref, *rest,
                training: bool, dropout_p: float):
    if training:
        bits_ref, o_ref = rest
    else:
        (o_ref,) = rest

    x = x_ref[...]  # bf16, (lane_tile, 128): two logical 64-wide rows per row

    # bf16 MXU matmuls with f32 accumulation; bias add / ReLU in f32.
    h1 = jnp.dot(x, w1_ref[...], preferred_element_type=jnp.float32) + b1_ref[...]
    h1 = jnp.maximum(h1, 0.0).astype(jnp.bfloat16)

    h2 = jnp.dot(h1, w2_ref[...], preferred_element_type=jnp.float32) + b2_ref[...]
    h2 = jnp.maximum(h2, 0.0).astype(jnp.bfloat16)

    y = jnp.dot(h2, w3_ref[...], preferred_element_type=jnp.float32) + b3_ref[...]

    if training and dropout_p > 0.0:
        # bits are uniform in [0, 2^31); integer compare (no float conversion).
        keep = bits_ref[...] >= jnp.int32(_DROP_THRESH_31)
        y = jnp.where(keep, y * (1.0 / (1.0 - dropout_p)), 0.0)

    o_ref[...] = y.astype(o_ref.dtype)


def _block_diag2(w):
    """(i, o) -> (2i, 2o) block-diagonal [[w, 0], [0, w]]."""
    z = jnp.zeros_like(w)
    top = jnp.concatenate([w, z], axis=1)
    bot = jnp.concatenate([z, w], axis=1)
    return jnp.concatenate([top, bot], axis=0)


def _round_up(n, m):
    return ((n + m - 1) // m) * m


def feed_forward(x, params, *, training=False, rng_key=None):
    """x: (..., N_EMBD) float32. Returns same shape/dtype."""
    w1, b1, w2, b2, w3, b3 = params
    orig_shape = x.shape
    x2 = x.reshape(-1, N_EMBD)
    n_rows = x2.shape[0]

    # Clamp the tile for tiny inputs, otherwise use the big tile; pad rows so
    # the grid divides evenly (padding is sliced off the output).
    row_tile = min(ROW_TILE, _round_up(n_rows, 16))
    lane_tile = row_tile // 2
    n_pad = _round_up(n_rows, row_tile)
    if n_pad != n_rows:
        x2 = jnp.pad(x2, ((0, n_pad - n_rows), (0, 0)))

    # Lane-dense view (row-major reshape is a pure view): row j = [x[2j] | x[2j+1]].
    xv = x2.astype(jnp.bfloat16).reshape(n_pad // 2, _D2)

    # Block-diagonal weights / duplicated biases so the kernel works directly
    # on the 128-wide view.  (In a real model these would be precomputed once.)
    w1b = _block_diag2(w1).astype(jnp.bfloat16)        # (128, 256)
    w2b = _block_diag2(w2).astype(jnp.bfloat16)        # (256, 256)
    w3b = _block_diag2(w3).astype(jnp.bfloat16)        # (256, 128)
    b1d = jnp.concatenate([b1, b1], axis=1)            # (1, 256) f32
    b2d = jnp.concatenate([b2, b2], axis=1)            # (1, 256) f32
    b3d = jnp.concatenate([b3, b3], axis=1)            # (1, 128) f32

    full = lambda i: (0, 0)
    in_specs = [
        pl.BlockSpec((lane_tile, _D2), lambda i: (i, 0)),   # x view tile
        pl.BlockSpec((_D2, _H2), full),                     # W1 block-diag
        pl.BlockSpec((1, _H2), full),                       # b1 dup
        pl.BlockSpec((_H2, _H2), full),                     # W2 block-diag
        pl.BlockSpec((1, _H2), full),                       # b2 dup
        pl.BlockSpec((_H2, _D2), full),                     # W3 block-diag
        pl.BlockSpec((1, _D2), full),                       # b3 dup
    ]
    args = [xv, w1b, b1d, w2b, b2d, w3b, b3d]

    if training and DROPOUT_P > 0.0:
        if rng_key is None:
            rng_key = jax.random.PRNGKey(0)
        # 31-bit uniform bits as int32 (signed compare in-kernel is always safe).
        rbits = jax.random.bits(rng_key, shape=(n_pad, N_EMBD), dtype=jnp.uint32)
        rbits = (rbits >> 1).astype(jnp.int32).reshape(n_pad // 2, _D2)
        in_specs.append(pl.BlockSpec((lane_tile, _D2), lambda i: (i, 0)))
        args.append(rbits)

    flops = 2 * n_pad * (N_EMBD * HIDDEN + HIDDEN * HIDDEN + HIDDEN * N_EMBD)
    bytes_accessed = (xv.size * 2 + n_pad * N_EMBD * 4
                      + (w1b.size + w2b.size + w3b.size) * 2
                      + (b1d.size + b2d.size + b3d.size) * 4)

    kernel = functools.partial(_ffn_kernel, training=training, dropout_p=DROPOUT_P)

    out = pl.pallas_call(
        kernel,
        out_shape=jax.ShapeDtypeStruct((n_pad // 2, _D2), x.dtype),
        grid_spec=pltpu.PrefetchScalarGridSpec(
            num_scalar_prefetch=0,
            grid=(n_pad // row_tile,),
            in_specs=in_specs,
            out_specs=pl.BlockSpec((lane_tile, _D2), lambda i: (i, 0)),
        ),
        compiler_params=pltpu.CompilerParams(
            dimension_semantics=("parallel",)),   # rows are independent (v7x megacore)
        cost_estimate=pl.CostEstimate(
            flops=flops, transcendentals=0, bytes_accessed=bytes_accessed),
    )(*args)

    y = out.reshape(n_pad, N_EMBD)[:n_rows]
    return y.reshape(orig_shape)


def init_params(key):
    """Deterministic init matching PyTorch nn.Linear default U(-1/sqrt(fan_in), +)."""
    ks = jax.random.split(key, 6)

    def linear(kw, kb, fan_in, fan_out):
        bound = 1.0 / jnp.sqrt(fan_in)
        w = jax.random.uniform(kw, (fan_in, fan_out), jnp.float32, -bound, bound)
        b = jax.random.uniform(kb, (1, fan_out), jnp.float32, -bound, bound)
        return w, b

    w1, b1 = linear(ks[0], ks[1], N_EMBD, HIDDEN)
    w2, b2 = linear(ks[2], ks[3], HIDDEN, HIDDEN)
    w3, b3 = linear(ks[4], ks[5], HIDDEN, N_EMBD)
    return (w1, b1, w2, b2, w3, b3)


if __name__ == "__main__":
    key = jax.random.PRNGKey(0)
    kp, kx, kd = jax.random.split(key, 3)
    params = init_params(kp)

    batch, seq = 2, 8
    x = jax.random.normal(kx, (batch, seq, N_EMBD), dtype=jnp.float32)

    # eval mode (Dropout = identity) -> deterministic, comparable to reference
    y = jax.block_until_ready(feed_forward(x, params, training=False))

    # pure-JAX reference with the same bf16-weight / f32-accumulate recipe
    w1, b1, w2, b2, w3, b3 = params
    xb = x.reshape(-1, N_EMBD).astype(jnp.bfloat16)
    h = jnp.maximum(jnp.dot(xb, w1.astype(jnp.bfloat16),
                            preferred_element_type=jnp.float32) + b1, 0.0)
    h = jnp.maximum(jnp.dot(h.astype(jnp.bfloat16), w2.astype(jnp.bfloat16),
                            preferred_element_type=jnp.float32) + b2, 0.0)
    ref = (jnp.dot(h.astype(jnp.bfloat16), w3.astype(jnp.bfloat16),
                   preferred_element_type=jnp.float32) + b3).reshape(x.shape)
    assert jnp.allclose(y, ref, atol=2e-3, rtol=2e-3), "mismatch vs reference"

    # exercise the fused-dropout (training) path once
    y_train = jax.block_until_ready(feed_forward(x, params, training=True, rng_key=kd))
    assert y_train.shape == x.shape
    assert bool(jnp.all(jnp.isfinite(y_train)))

    print("KERNEL_OK")
</pallas_src>

<mosaic_0001>
module attributes {stable_mosaic.version = 11 : i64} {
  func.func @_ffn_kernel(%arg0: i32, %arg1: memref<8x128xbf16, #tpu.memory_space<vmem>>, %arg2: memref<128x256xbf16, #tpu.memory_space<vmem>>, %arg3: memref<1x256xf32, #tpu.memory_space<vmem>>, %arg4: memref<256x256xbf16, #tpu.memory_space<vmem>>, %arg5: memref<1x256xf32, #tpu.memory_space<vmem>>, %arg6: memref<256x128xbf16, #tpu.memory_space<vmem>>, %arg7: memref<1x128xf32, #tpu.memory_space<vmem>>, %arg8: memref<8x128xf32, #tpu.memory_space<vmem>>) attributes {dimension_semantics = [#tpu.dimension_semantics<parallel>], iteration_bounds = array<i64: 1>, scalar_prefetch = 0 : i64, scratch_operands = 0 : i64, tpu.core_type = #tpu.core_type<tc>, window_params = [{transform_indices = @transform_0, window_bounds = array<i64: 8, 128>}, {pipeline_mode = #tpu.pipeline_mode<synchronous>, transform_indices = @transform_1, window_bounds = array<i64: 128, 256>}, {pipeline_mode = #tpu.pipeline_mode<synchronous>, transform_indices = @transform_2, window_bounds = array<i64: 1, 256>}, {pipeline_mode = #tpu.pipeline_mode<synchronous>, transform_indices = @transform_3, window_bounds = array<i64: 256, 256>}, {pipeline_mode = #tpu.pipeline_mode<synchronous>, transform_indices = @transform_4, window_bounds = array<i64: 1, 256>}, {pipeline_mode = #tpu.pipeline_mode<synchronous>, transform_indices = @transform_5, window_bounds = array<i64: 256, 128>}, {pipeline_mode = #tpu.pipeline_mode<synchronous>, transform_indices = @transform_6, window_bounds = array<i64: 1, 128>}, {transform_indices = @transform_7, window_bounds = array<i64: 8, 128>}]} {
    %c0 = arith.constant 0 : index
    %c0_0 = arith.constant 0 : index
    %0 = vector.load %arg1[%c0, %c0_0] : memref<8x128xbf16, #tpu.memory_space<vmem>>, vector<8x128xbf16>
    %c0_1 = arith.constant 0 : index
    %c0_2 = arith.constant 0 : index
    %1 = vector.load %arg2[%c0_1, %c0_2] : memref<128x256xbf16, #tpu.memory_space<vmem>>, vector<128x256xbf16>
    %cst = arith.constant dense<0.000000e+00> : vector<8x256xf32>
    %2 = tpu.matmul %0, %1, %cst {dimension_numbers = #tpu.dot_dimension_numbers<[1], [0], [0], [1], [0, 0, 1, 1], [], []>} : vector<8x128xbf16>, vector<128x256xbf16>, vector<8x256xf32> -> vector<8x256xf32>
    %c0_3 = arith.constant 0 : index
    %c0_4 = arith.constant 0 : index
    %3 = vector.load %arg3[%c0_3, %c0_4] : memref<1x256xf32, #tpu.memory_space<vmem>>, vector<1x256xf32>
    %4 = vector.broadcast %3 : vector<1x256xf32> to vector<8x256xf32>
    %5 = arith.addf %2, %4 : vector<8x256xf32>
    %cst_5 = arith.constant 0.000000e+00 : f32
    %6 = vector.broadcast %cst_5 : f32 to vector<8x256xf32>
    %7 = arith.maximumf %5, %6 : vector<8x256xf32>
    %8 = arith.truncf %7 : vector<8x256xf32> to vector<8x256xbf16>
    %c0_6 = arith.constant 0 : index
    %c0_7 = arith.constant 0 : index
    %9 = vector.load %arg4[%c0_6, %c0_7] : memref<256x256xbf16, #tpu.memory_space<vmem>>, vector<256x256xbf16>
    %cst_8 = arith.constant dense<0.000000e+00> : vector<8x256xf32>
    %10 = tpu.matmul %8, %9, %cst_8 {dimension_numbers = #tpu.dot_dimension_numbers<[1], [0], [0], [1], [0, 0, 1, 1], [], []>} : vector<8x256xbf16>, vector<256x256xbf16>, vector<8x256xf32> -> vector<8x256xf32>
    %c0_9 = arith.constant 0 : index
    %c0_10 = arith.constant 0 : index
    %11 = vector.load %arg5[%c0_9, %c0_10] : memref<1x256xf32, #tpu.memory_space<vmem>>, vector<1x256xf32>
    %12 = vector.broadcast %11 : vector<1x256xf32> to vector<8x256xf32>
    %13 = arith.addf %10, %12 : vector<8x256xf32>
    %cst_11 = arith.constant 0.000000e+00 : f32
    %14 = vector.broadcast %cst_11 : f32 to vector<8x256xf32>
    %15 = arith.maximumf %13, %14 : vector<8x256xf32>
    %16 = arith.truncf %15 : vector<8x256xf32> to vector<8x256xbf16>
    %c0_12 = arith.constant 0 : index
    %c0_13 = arith.constant 0 : index
    %17 = vector.load %arg6[%c0_12, %c0_13] : memref<256x128xbf16, #tpu.memory_space<vmem>>, vector<256x128xbf16>
    %cst_14 = arith.constant dense<0.000000e+00> : vector<8x128xf32>
    %18 = tpu.matmul %16, %17, %cst_14 {dimension_numbers = #tpu.dot_dimension_numbers<[1], [0], [0], [1], [0, 0, 1, 1], [], []>} : vector<8x256xbf16>, vector<256x128xbf16>, vector<8x128xf32> -> vector<8x128xf32>
    %c0_15 = arith.constant 0 : index
    %c0_16 = arith.constant 0 : index
    %19 = vector.load %arg7[%c0_15, %c0_16] : memref<1x128xf32, #tpu.memory_space<vmem>>, vector<1x128xf32>
    %20 = vector.broadcast %19 : vector<1x128xf32> to vector<8x128xf32>
    %21 = arith.addf %18, %20 : vector<8x128xf32>
    %c0_17 = arith.constant 0 : index
    %c0_18 = arith.constant 0 : index
    %22 = vector.load %arg8[%c0_17, %c0_18] : memref<8x128xf32, #tpu.memory_space<vmem>>, vector<8x128xf32>
    tpu.vector_store %arg8[%c0_17, %c0_18], %21 {strides = array<i32>} : memref<8x128xf32, #tpu.memory_space<vmem>>, vector<8x128xf32>,
    return
  }
  func.func @transform_0(%arg0: i32) -> (i32, i32) {
    %c0_i32 = arith.constant 0 : i32
    %c0_i32_0 = arith.constant 0 : i32
    return %arg0, %c0_i32 : i32, i32
  }
  func.func @transform_1(%arg0: i32) -> (i32, i32) {
    %c0_i32 = arith.constant 0 : i32
    %c0_i32_0 = arith.constant 0 : i32
    %c0_i32_1 = arith.constant 0 : i32
    return %c0_i32, %c0_i32_0 : i32, i32
  }
  func.func @transform_2(%arg0: i32) -> (i32, i32) {
    %c0_i32 = arith.constant 0 : i32
    %c0_i32_0 = arith.constant 0 : i32
    %c0_i32_1 = arith.constant 0 : i32
    return %c0_i32, %c0_i32_0 : i32, i32
  }
  func.func @transform_3(%arg0: i32) -> (i32, i32) {
    %c0_i32 = arith.constant 0 : i32
    %c0_i32_0 = arith.constant 0 : i32
    %c0_i32_1 = arith.constant 0 : i32
    return %c0_i32, %c0_i32_0 : i32, i32
  }
  func.func @transform_4(%arg0: i32) -> (i32, i32) {
    %c0_i32 = arith.constant 0 : i32
    %c0_i32_0 = arith.constant 0 : i32
    %c0_i32_1 = arith.constant 0 : i32
    return %c0_i32, %c0_i32_0 : i32, i32
  }
  func.func @transform_5(%arg0: i32) -> (i32, i32) {
    %c0_i32 = arith.constant 0 : i32
    %c0_i32_0 = arith.constant 0 : i32
    %c0_i32_1 = arith.constant 0 : i32
    return %c0_i32, %c0_i32_0 : i32, i32
  }
  func.func @transform_6(%arg0: i32) -> (i32, i32) {
    %c0_i32 = arith.constant 0 : i32
    %c0_i32_0 = arith.constant 0 : i32
    %c0_i32_1 = arith.constant 0 : i32
    return %c0_i32, %c0_i32_0 : i32, i32
  }
  func.func @transform_7(%arg0: i32) -> (i32, i32) {
    %c0_i32 = arith.constant 0 : i32
    %c0_i32_0 = arith.constant 0 : i32
    return %arg0, %c0_i32 : i32, i32
  }
}

</mosaic_0001>

<llo_original>
// kernel: tpu_custom_call.1
$region0: #{tpu_custom_call.1}
  #allocation0 [shape = 'u32[]', space=smem, size = 0x4, offset = 0x4, fixed_abs, tag = 'smem constant byte address 0x4 - core index']
  #allocation1 [shape = 'u32[72,128]{1,0:T(1,128)}', space=vmem, size = 0x9000, scoped, tag = 'internal scratch']
  %s0 = inlined_call_operand.hbm [shape: bf16[8,128], index: 0, kind: input, shape index: {}]
  %s1 = inlined_call_operand.hbm [shape: bf16[128,256], index: 1, kind: input, shape index: {}]
  %s2 = inlined_call_operand.hbm [shape: f32[1,256], index: 2, kind: input, shape index: {}]
  %s3 = inlined_call_operand.hbm [shape: bf16[256,256], index: 3, kind: input, shape index: {}]
  %s4 = inlined_call_operand.vmem [shape: f32[1,256], index: 4, kind: input, shape index: {}]
  %s5 = inlined_call_operand.hbm [shape: bf16[256,128], index: 5, kind: input, shape index: {}]
  %s6 = inlined_call_operand.vmem [shape: f32[1,128], index: 6, kind: input, shape index: {}]
  %s7 = inlined_call_operand.hbm [shape: f32[8,128], index: 7, kind: output, shape index: {}]
  %s8 = sld [smem:[#allocation0]]
  $region58: #{tpu_custom_call.1} parent=0
    _
  %s10 = ssub.s32 1, %s8
  %s11 = scalar_select 0, %s10, %s8
  $region1: #{tpu_custom_call.1} parent=0
    #allocation2 [shape = 'u8[2048]{0}', space=vmem, size = 0x800, scoped, tag = 'input window, operand 0, single buffered']
    #allocation3 [shape = 's32[1]{0}', space=sflag, size = 0x4, scoped, tag = 'scoped memory for tpu_custom_call.1']
    #allocation4 [shape = 's32[1]{0}', space=sflag, size = 0x4, scoped, tag = 'scoped memory for tpu_custom_call.1']
    #allocation5 [shape = 'u8[65536]{0}', space=vmem, size = 0x10000, scoped, tag = 'input window, operand 1, single buffered']
    #allocation6 [shape = 's32[1]{0}', space=sflag, size = 0x4, scoped, tag = 'scoped memory for tpu_custom_call.1']
    #allocation7 [shape = 'u8[1024]{0}', space=vmem, size = 0x400, scoped, tag = 'input window, operand 2, single buffered']
    #allocation8 [shape = 'u8[131072]{0}', space=vmem, size = 0x20000, scoped, tag = 'input window, operand 3, single buffered']
    #allocation9 [shape = 's32[1]{0}', space=sflag, size = 0x4, scoped, tag = 'scoped memory for tpu_custom_call.1']
    #allocation10 [shape = 'u8[65536]{0}', space=vmem, size = 0x10000, scoped, tag = 'input window, operand 5, single buffered']
    #allocation11 [shape = 'u8[4096]{0}', space=vmem, size = 0x1000, scoped, tag = 'output window, operand 0, single buffered']
    %12 = vsyncpa [#allocation3], 0
    %13 = vsyncpa [#allocation6], 0
    %14 = vsyncpa [#allocation9], 0
    %15 = vsyncpa [#allocation4], 0
    // Predicated region
    $region2: #{tpu_custom_call.1} parent=1 // pred_check
      _
    $region3: #{tpu_custom_call.1} parent=1 // pred_check_branch
      %17 = sbr.rel (0) target = $region5
    $region4: #{tpu_custom_call.1} parent=1 // pred_region
      %19 = vsyncadd [#allocation3], 0
      %s21 = sshll.u32 %s0, 4
      %s22 = int_to_ptr.hbm [resolvable:$true] %s21
      %s23 = sshll.u32 [#allocation2], 4
      %s24 = int_to_ptr.vmem [resolvable:$true] %s23
      %26 = dma.hbm_to_vmem [thread:$0]  %s22, 64, %s24, [#allocation3]
    $region5: #{tpu_custom_call.1} parent=1 // pred_fallthru
      _
    // Predicated region
    $region6: #{tpu_custom_call.1} parent=1 // pred_check
      _
    $region7: #{tpu_custom_call.1} parent=1 // pred_check_branch
      %28 = sbr.rel (0) target = $region9
    $region8: #{tpu_custom_call.1} parent=1 // pred_region
      %30 = vsyncadd [#allocation6], 0
      %s31 = sshll.u32 %s1, 4
      %s32 = int_to_ptr.hbm [resolvable:$true] %s31
      %s33 = sshll.u32 [#allocation5], 4
      %s34 = int_to_ptr.vmem [resolvable:$true] %s33
      %39 = dma.hbm_to_vmem [thread:$0]  %s32, 2048, %s34, [#allocation6], 128, 128, 8
    $region9: #{tpu_custom_call.1} parent=1 // pred_fallthru
      _
    // Predicated region
    $region10: #{tpu_custom_call.1} parent=1 // pred_check
      _
    $region11: #{tpu_custom_call.1} parent=1 // pred_check_branch
      %41 = sbr.rel (0) target = $region13
    $region12: #{tpu_custom_call.1} parent=1 // pred_region
      %43 = vsyncadd [#allocation6], 0
      %s45 = sshll.u32 %s2, 4
      %s46 = int_to_ptr.hbm [resolvable:$true] %s45
      %s47 = sshll.u32 [#allocation7], 4
      %s48 = int_to_ptr.vmem [resolvable:$true] %s47
      %50 = dma.hbm_to_vmem [thread:$0]  %s46, 32, %s48, [#allocation6]
    $region13: #{tpu_custom_call.1} parent=1 // pred_fallthru
      _
    // Predicated region
    $region14: #{tpu_custom_call.1} parent=1 // pred_check
      _
    $region15: #{tpu_custom_call.1} parent=1 // pred_check_branch
      %52 = sbr.rel (0) target = $region17
    $region16: #{tpu_custom_call.1} parent=1 // pred_region
      %54 = vsyncadd [#allocation9], 0
      %s55 = sshll.u32 %s3, 4
      %s56 = int_to_ptr.hbm [resolvable:$true] %s55
      %s57 = sshll.u32 [#allocation8], 4
      %s58 = int_to_ptr.vmem [resolvable:$true] %s57
      %63 = dma.hbm_to_vmem [thread:$0]  %s56, 4096, %s58, [#allocation9], 128, 128, 8
    $region17: #{tpu_custom_call.1} parent=1 // pred_fallthru
      _
    // Predicated region
    $region18: #{tpu_custom_call.1} parent=1 // pred_check
      _
    $region19: #{tpu_custom_call.1} parent=1 // pred_check_branch
      %65 = sbr.rel (0) target = $region21
    $region20: #{tpu_custom_call.1} parent=1 // pred_region
      _
    $region21: #{tpu_custom_call.1} parent=1 // pred_fallthru
      _
    // Predicated region
    $region22: #{tpu_custom_call.1} parent=1 // pred_check
      _
    $region23: #{tpu_custom_call.1} parent=1 // pred_check_branch
      %67 = sbr.rel (0) target = $region25
    $region24: #{tpu_custom_call.1} parent=1 // pred_region
      %69 = vsyncadd [#allocation9], 0
      %s70 = sshll.u32 %s5, 4
      %s71 = int_to_ptr.hbm [resolvable:$true] %s70
      %s72 = sshll.u32 [#allocation10], 4
      %s73 = int_to_ptr.vmem [resolvable:$true] %s72
      %78 = dma.hbm_to_vmem [thread:$0]  %s71, 2048, %s73, [#allocation9], 64, 64, 4
    $region25: #{tpu_custom_call.1} parent=1 // pred_fallthru
      _
    // Predicated region
    $region26: #{tpu_custom_call.1} parent=1 // pred_check
      _
    $region27: #{tpu_custom_call.1} parent=1 // pred_check_branch
      %80 = sbr.rel (0) target = $region29
    $region28: #{tpu_custom_call.1} parent=1 // pred_region
      _
    $region29: #{tpu_custom_call.1} parent=1 // pred_fallthru
      _
    // Predicated region
    $region30: #{tpu_custom_call.1} parent=1 // pred_check
      _
    $region31: #{tpu_custom_call.1} parent=1 // pred_check_branch
      %82 = sbr.rel (0) target = $region33
    $region32: #{tpu_custom_call.1} parent=1 // pred_region
      %84 = dma.done [#allocation3], 64
    $region33: #{tpu_custom_call.1} parent=1 // pred_fallthru
      _
    // Predicated region
    $region34: #{tpu_custom_call.1} parent=1 // pred_check
      _
    $region35: #{tpu_custom_call.1} parent=1 // pred_check_branch
      %86 = sbr.rel (0) target = $region37
    $region36: #{tpu_custom_call.1} parent=1 // pred_region
      %88 = dma.done [#allocation6], 2048
    $region37: #{tpu_custom_call.1} parent=1 // pred_fallthru
      _
    // Predicated region
    $region38: #{tpu_custom_call.1} parent=1 // pred_check
      _
    $region39: #{tpu_custom_call.1} parent=1 // pred_check_branch
      %90 = sbr.rel (0) target = $region41
    $region40: #{tpu_custom_call.1} parent=1 // pred_region
      %92 = dma.done [#allocation6], 32
    $region41: #{tpu_custom_call.1} parent=1 // pred_fallthru
      _
    // Predicated region
    $region42: #{tpu_custom_call.1} parent=1 // pred_check
      _
    $region43: #{tpu_custom_call.1} parent=1 // pred_check_branch
      %94 = sbr.rel (0) target = $region45
    $region44: #{tpu_custom_call.1} parent=1 // pred_region
      %96 = dma.done [#allocation9], 4096
    $region45: #{tpu_custom_call.1} parent=1 // pred_fallthru
      _
    // Predicated region
    $region46: #{tpu_custom_call.1} parent=1 // pred_check
      _
    $region47: #{tpu_custom_call.1} parent=1 // pred_check_branch
      %98 = sbr.rel (0) target = $region49
    $region48: #{tpu_custom_call.1} parent=1 // pred_region
      %100 = dma.done [#allocation9], 2048
    $region49: #{tpu_custom_call.1} parent=1 // pred_fallthru
      _
    %v101 = vld [vmem:[#allocation2] sm:$0xf]
    %v102 = vld [vmem:[#allocation5] sm:$0xff]
    %v103 = vld [vmem:[#allocation5 + $0x8] sm:$0xff]
    %v104 = vld [vmem:[#allocation5 + $0x10] sm:$0xff]
    %v105 = vld [vmem:[#allocation5 + $0x18] sm:$0xff]
    %v106 = vld [vmem:[#allocation5 + $0x20] sm:$0xff]
    %v107 = vld [vmem:[#allocation5 + $0x28] sm:$0xff]
    %v108 = vld [vmem:[#allocation5 + $0x30] sm:$0xff]
    %v109 = vld [vmem:[#allocation5 + $0x38] sm:$0xff]
    %v110 = vld [vmem:[#allocation5 + $0x40] sm:$0xff]
    %v111 = vld [vmem:[#allocation5 + $0x48] sm:$0xff]
    %v112 = vld [vmem:[#allocation5 + $0x50] sm:$0xff]
    %v113 = vld [vmem:[#allocation5 + $0x58] sm:$0xff]
    %v114 = vld [vmem:[#allocation5 + $0x60] sm:$0xff]
    %v115 = vld [vmem:[#allocation5 + $0x68] sm:$0xff]
    %v116 = vld [vmem:[#allocation5 + $0x70] sm:$0xff]
    %v117 = vld [vmem:[#allocation5 + $0x78] sm:$0xff]
    %v118 = vld [vmem:[#allocation7] sm:$0x3]
    %v120 = vperm.slane %v118, 0
    %v121 = vperm.slane %v118, 1
    %v140 = vunpack.c.l.b16 %v102
    %v141 = vunpack.c.h.b16 %v102
    %v142 = vunpack.c.l.b16 %v103
    %v143 = vunpack.c.h.b16 %v103
    %v144 = vunpack.c.l.b16 %v104
    %v145 = vunpack.c.h.b16 %v104
    %v146 = vunpack.c.l.b16 %v105
    %v147 = vunpack.c.h.b16 %v105
    %v148 = vunpack.c.l.b16 %v106
    %v149 = vunpack.c.h.b16 %v106
    %v150 = vunpack.c.l.b16 %v107
    %v151 = vunpack.c.h.b16 %v107
    %v152 = vunpack.c.l.b16 %v108
    %v153 = vunpack.c.h.b16 %v108
    %v154 = vunpack.c.l.b16 %v109
    %v155 = vunpack.c.h.b16 %v109
    %v156 = vunpack.c.l.b16 %v110
    %v157 = vunpack.c.h.b16 %v110
    %v158 = vunpack.c.l.b16 %v111
    %v159 = vunpack.c.h.b16 %v111
    %v160 = vunpack.c.l.b16 %v112
    %v161 = vunpack.c.h.b16 %v112
    %v162 = vunpack.c.l.b16 %v113
    %v163 = vunpack.c.h.b16 %v113
    %v164 = vunpack.c.l.b16 %v114
    %v165 = vunpack.c.h.b16 %v114
    %v166 = vunpack.c.l.b16 %v115
    %v167 = vunpack.c.h.b16 %v115
    %v168 = vunpack.c.l.b16 %v116
    %v169 = vunpack.c.h.b16 %v116
    %v170 = vunpack.c.l.b16 %v117
    %v171 = vunpack.c.h.b16 %v117
    %v172 = vpack.c.b16 %v142, %v140
    %v173 = vpack.c.b16 %v143, %v141
    %v174 = vpack.c.b16 %v146, %v144
    %v175 = vpack.c.b16 %v147, %v145
    %v176 = vpack.c.b16 %v150, %v148
    %v177 = vpack.c.b16 %v151, %v149
    %v178 = vpack.c.b16 %v154, %v152
    %v179 = vpack.c.b16 %v155, %v153
    %v180 = vpack.c.b16 %v158, %v156
    %v181 = vpack.c.b16 %v159, %v157
    %v182 = vpack.c.b16 %v162, %v160
    %v183 = vpack.c.b16 %v163, %v161
    %v184 = vpack.c.b16 %v166, %v164
    %v185 = vpack.c.b16 %v167, %v165
    %v186 = vpack.c.b16 %v170, %v168
    %v187 = vpack.c.b16 %v171, %v169
    %204 = vmatpush.bf16.msra.mxu0 %v186
    %205 = vmatpush.bf16.msra.mxu0 %v184
    %206 = vmatpush.bf16.msra.mxu0 %v182
    %207 = vmatpush.bf16.msra.mxu0 %v180
    %208 = vmatpush.bf16.msra.mxu0 %v178
    %209 = vmatpush.bf16.msra.mxu0 %v176
    %210 = vmatpush.bf16.msra.mxu0 %v174
    %211 = vmatpush.bf16.msra.mxu0 %v172
    %212 = vmatmul.bf16.gmra.mxu0 %v101
    %v213 = vpop.f32.mrf.mxu0
    %v214 = vadd.f32 %v120, %v213
    %v215 = vpop.f32.mrf.mxu0
    %216 = vdwg.mxu0
    %217 = vmatpush.bf16.msra.mxu0 %v187
    %218 = vmatpush.bf16.msra.mxu0 %v185
    %219 = vmatpush.bf16.msra.mxu0 %v183
    %220 = vmatpush.bf16.msra.mxu0 %v181
    %221 = vmatpush.bf16.msra.mxu0 %v179
    %222 = vmatpush.bf16.msra.mxu0 %v177
    %223 = vmatpush.bf16.msra.mxu0 %v175
    %224 = vmatpush.bf16.msra.mxu0 %v173
    %225 = vmatmul.bf16.gmra.mxu0 %v101
    %v226 = vpop.f32.mrf.mxu0
    %v227 = vadd.f32 %v121, %v226
    %v228 = vpop.f32.mrf.mxu0
    %229 = vdwg.mxu0
    %v230 = vmax.f32 %v214, 0.0
    %v231 = vmax.f32 %v227, 0.0
    %v232 = vpack.c.bf16 %v230, %v230
    %v233 = vpack.c.bf16 %v231, %v231
    %v234 = vld [vmem:[#allocation8] sm:$0xff]
    %v235 = vld [vmem:[#allocation8 + $0x8] sm:$0xff]
    %v236 = vld [vmem:[#allocation8 + $0x10] sm:$0xff]
    %v237 = vld [vmem:[#allocation8 + $0x18] sm:$0xff]
    %v238 = vld [vmem:[#allocation8 + $0x20] sm:$0xff]
    %v239 = vld [vmem:[#allocation8 + $0x28] sm:$0xff]
    %v240 = vld [vmem:[#allocation8 + $0x30] sm:$0xff]
    %v241 = vld [vmem:[#allocation8 + $0x38] sm:$0xff]
    %v242 = vld [vmem:[#allocation8 + $0x40] sm:$0xff]
    %v243 = vld [vmem:[#allocation8 + $0x48] sm:$0xff]
    %v244 = vld [vmem:[#allocation8 + $0x50] sm:$0xff]
    %v245 = vld [vmem:[#allocation8 + $0x58] sm:$0xff]
    %v246 = vld [vmem:[#allocation8 + $0x60] sm:$0xff]
    %v247 = vld [vmem:[#allocation8 + $0x68] sm:$0xff]
    %v248 = vld [vmem:[#allocation8 + $0x70] sm:$0xff]
    %v249 = vld [vmem:[#allocation8 + $0x78] sm:$0xff]
    %v250 = vld [vmem:[#allocation8 + $0x80] sm:$0xff]
    %v251 = vld [vmem:[#allocation8 + $0x88] sm:$0xff]
    %v252 = vld [vmem:[#allocation8 + $0x90] sm:$0xff]
    %v253 = vld [vmem:[#allocation8 + $0x98] sm:$0xff]
    %v254 = vld [vmem:[#allocation8 + $0xa0] sm:$0xff]
    %v255 = vld [vmem:[#allocation8 + $0xa8] sm:$0xff]
    %v256 = vld [vmem:[#allocation8 + $0xb0] sm:$0xff]
    %v257 = vld [vmem:[#allocation8 + $0xb8] sm:$0xff]
    %v258 = vld [vmem:[#allocation8 + $0xc0] sm:$0xff]
    %v259 = vld [vmem:[#allocation8 + $0xc8] sm:$0xff]
    %v260 = vld [vmem:[#allocation8 + $0xd0] sm:$0xff]
    %v261 = vld [vmem:[#allocation8 + $0xd8] sm:$0xff]
    %v262 = vld [vmem:[#allocation8 + $0xe0] sm:$0xff]
    %v263 = vld [vmem:[#allocation8 + $0xe8] sm:$0xff]
    %v264 = vld [vmem:[#allocation8 + $0xf0] sm:$0xff]
    %v265 = vld [vmem:[#allocation8 + $0xf8] sm:$0xff]
    %v266 = vld [vmem:[%s4] sm:$0x3]
    %v268 = vperm.slane %v266, 0
    %v269 = vperm.slane %v266, 1
    %v304 = vunpack.c.l.b16 %v234
    %v305 = vunpack.c.h.b16 %v234
    %v306 = vunpack.c.l.b16 %v235
    %v307 = vunpack.c.h.b16 %v235
    %v308 = vunpack.c.l.b16 %v236
    %v309 = vunpack.c.h.b16 %v236
    %v310 = vunpack.c.l.b16 %v237
    %v311 = vunpack.c.h.b16 %v237
    %v312 = vunpack.c.l.b16 %v238
    %v313 = vunpack.c.h.b16 %v238
    %v314 = vunpack.c.l.b16 %v239
    %v315 = vunpack.c.h.b16 %v239
    %v316 = vunpack.c.l.b16 %v240
    %v317 = vunpack.c.h.b16 %v240
    %v318 = vunpack.c.l.b16 %v241
    %v319 = vunpack.c.h.b16 %v241
    %v320 = vunpack.c.l.b16 %v242
    %v321 = vunpack.c.h.b16 %v242
    %v322 = vunpack.c.l.b16 %v243
    %v323 = vunpack.c.h.b16 %v243
    %v324 = vunpack.c.l.b16 %v244
    %v325 = vunpack.c.h.b16 %v244
    %v326 = vunpack.c.l.b16 %v245
    %v327 = vunpack.c.h.b16 %v245
    %v328 = vunpack.c.l.b16 %v246
    %v329 = vunpack.c.h.b16 %v246
    %v330 = vunpack.c.l.b16 %v247
    %v331 = vunpack.c.h.b16 %v247
    %v332 = vunpack.c.l.b16 %v248
    %v333 = vunpack.c.h.b16 %v248
    %v334 = vunpack.c.l.b16 %v249
    %v335 = vunpack.c.h.b16 %v249
    %v336 = vunpack.c.l.b16 %v250
    %v337 = vunpack.c.h.b16 %v250
    %v338 = vunpack.c.l.b16 %v251
    %v339 = vunpack.c.h.b16 %v251
    %v340 = vunpack.c.l.b16 %v252
    %v341 = vunpack.c.h.b16 %v252
    %v342 = vunpack.c.l.b16 %v253
    %v343 = vunpack.c.h.b16 %v253
    %v344 = vunpack.c.l.b16 %v254
    %v345 = vunpack.c.h.b16 %v254
    %v346 = vunpack.c.l.b16 %v255
    %v347 = vunpack.c.h.b16 %v255
    %v348 = vunpack.c.l.b16 %v256
    %v349 = vunpack.c.h.b16 %v256
    %v350 = vunpack.c.l.b16 %v257
    %v351 = vunpack.c.h.b16 %v257
    %v352 = vunpack.c.l.b16 %v258
    %v353 = vunpack.c.h.b16 %v258
    %v354 = vunpack.c.l.b16 %v259
    %v355 = vunpack.c.h.b16 %v259
    %v356 = vunpack.c.l.b16 %v260
    %v357 = vunpack.c.h.b16 %v260
    %v358 = vunpack.c.l.b16 %v261
    %v359 = vunpack.c.h.b16 %v261
    %v360 = vunpack.c.l.b16 %v262
    %v361 = vunpack.c.h.b16 %v262
    %v362 = vunpack.c.l.b16 %v263
    %v363 = vunpack.c.h.b16 %v263
    %v364 = vunpack.c.l.b16 %v264
    %v365 = vunpack.c.h.b16 %v264
    %v366 = vunpack.c.l.b16 %v265
    %v367 = vunpack.c.h.b16 %v265
    %v368 = vpack.c.b16 %v306, %v304
    %v369 = vpack.c.b16 %v307, %v305
    %v370 = vpack.c.b16 %v310, %v308
    %v371 = vpack.c.b16 %v311, %v309
    %v372 = vpack.c.b16 %v314, %v312
    %v373 = vpack.c.b16 %v315, %v313
    %v374 = vpack.c.b16 %v318, %v316
    %v375 = vpack.c.b16 %v319, %v317
    %v376 = vpack.c.b16 %v322, %v320
    %v377 = vpack.c.b16 %v323, %v321
    %v378 = vpack.c.b16 %v326, %v324
    %v379 = vpack.c.b16 %v327, %v325
    %v380 = vpack.c.b16 %v330, %v328
    %v381 = vpack.c.b16 %v331, %v329
    %v382 = vpack.c.b16 %v334, %v332
    %v383 = vpack.c.b16 %v335, %v333
    %v384 = vpack.c.b16 %v338, %v336
    %v385 = vpack.c.b16 %v339, %v337
    %v386 = vpack.c.b16 %v342, %v340
    %v387 = vpack.c.b16 %v343, %v341
    %v388 = vpack.c.b16 %v346, %v344
    %v389 = vpack.c.b16 %v347, %v345
    %v390 = vpack.c.b16 %v350, %v348
    %v391 = vpack.c.b16 %v351, %v349
    %v392 = vpack.c.b16 %v354, %v352
    %v393 = vpack.c.b16 %v355, %v353
    %v394 = vpack.c.b16 %v358, %v356
    %v395 = vpack.c.b16 %v359, %v357
    %v396 = vpack.c.b16 %v362, %v360
    %v397 = vpack.c.b16 %v363, %v361
    %v398 = vpack.c.b16 %v366, %v364
    %v399 = vpack.c.b16 %v367, %v365
    %432 = vmatpush.bf16.msra.mxu0 %v382
    %433 = vmatpush.bf16.msra.mxu0 %v380
    %434 = vmatpush.bf16.msra.mxu0 %v378
    %435 = vmatpush.bf16.msra.mxu0 %v376
    %436 = vmatpush.bf16.msra.mxu0 %v374
    %437 = vmatpush.bf16.msra.mxu0 %v372
    %438 = vmatpush.bf16.msra.mxu0 %v370
    %439 = vmatpush.bf16.msra.mxu0 %v368
    %440 = vmatmul.bf16.gmra.mxu0 %v232
    %v441 = vpop.f32.mrf.mxu0
    %v442 = vadd.f32 %v268, %v441
    %v443 = vpop.f32.mrf.mxu0
    %444 = vdwg.mxu0
    %445 = vmatpush.bf16.msra.mxu0 %v398
    %446 = vmatpush.bf16.msra.mxu0 %v396
    %447 = vmatpush.bf16.msra.mxu0 %v394
    %448 = vmatpush.bf16.msra.mxu0 %v392
    %449 = vmatpush.bf16.msra.mxu0 %v390
    %450 = vmatpush.bf16.msra.mxu0 %v388
    %451 = vmatpush.bf16.msra.mxu0 %v386
    %452 = vmatpush.bf16.msra.mxu0 %v384
    %453 = vmatmul.bf16.gmra.mxu0 %v233
    %v454 = vpop.f32.mrf.mxu0
    %v455 = vadd.f32 %v442, %v454
    %v456 = vpop.f32.mrf.mxu0
    %457 = vdwg.mxu0
    %458 = vmatpush.bf16.msra.mxu0 %v383
    %459 = vmatpush.bf16.msra.mxu0 %v381
    %460 = vmatpush.bf16.msra.mxu0 %v379
    %461 = vmatpush.bf16.msra.mxu0 %v377
    %462 = vmatpush.bf16.msra.mxu0 %v375
    %463 = vmatpush.bf16.msra.mxu0 %v373
    %464 = vmatpush.bf16.msra.mxu0 %v371
    %465 = vmatpush.bf16.msra.mxu0 %v369
    %466 = vmatmul.bf16.gmra.mxu0 %v232
    %v467 = vpop.f32.mrf.mxu0
    %v468 = vadd.f32 %v269, %v467
    %v469 = vpop.f32.mrf.mxu0
    %470 = vdwg.mxu0
    %471 = vmatpush.bf16.msra.mxu0 %v399
    %472 = vmatpush.bf16.msra.mxu0 %v397
    %473 = vmatpush.bf16.msra.mxu0 %v395
    %474 = vmatpush.bf16.msra.mxu0 %v393
    %475 = vmatpush.bf16.msra.mxu0 %v391
    %476 = vmatpush.bf16.msra.mxu0 %v389
    %477 = vmatpush.bf16.msra.mxu0 %v387
    %478 = vmatpush.bf16.msra.mxu0 %v385
    %479 = vmatmul.bf16.gmra.mxu0 %v233
    %v480 = vpop.f32.mrf.mxu0
    %v481 = vadd.f32 %v468, %v480
    %v482 = vpop.f32.mrf.mxu0
    %483 = vdwg.mxu0
    %v484 = vmax.f32 %v455, 0.0
    %v485 = vmax.f32 %v481, 0.0
    %v486 = vpack.c.bf16 %v484, %v484
    %v487 = vpack.c.bf16 %v485, %v485
    %v488 = vld [vmem:[#allocation10] sm:$0xf]
    %v489 = vld [vmem:[#allocation10 + $0x4] sm:$0xf]
    %v490 = vld [vmem:[#allocation10 + $0x8] sm:$0xf]
    %v491 = vld [vmem:[#allocation10 + $0xc] sm:$0xf]
    %v492 = vld [vmem:[#allocation10 + $0x10] sm:$0xf]
    %v493 = vld [vmem:[#allocation10 + $0x14] sm:$0xf]
    %v494 = vld [vmem:[#allocation10 + $0x18] sm:$0xf]
    %v495 = vld [vmem:[#allocation10 + $0x1c] sm:$0xf]
    %v496 = vld [vmem:[#allocation10 + $0x20] sm:$0xf]
    %v497 = vld [vmem:[#allocation10 + $0x24] sm:$0xf]
    %v498 = vld [vmem:[#allocation10 + $0x28] sm:$0xf]
    %v499 = vld [vmem:[#allocation10 + $0x2c] sm:$0xf]
    %v500 = vld [vmem:[#allocation10 + $0x30] sm:$0xf]
    %v501 = vld [vmem:[#allocation10 + $0x34] sm:$0xf]
    %v502 = vld [vmem:[#allocation10 + $0x38] sm:$0xf]
    %v503 = vld [vmem:[#allocation10 + $0x3c] sm:$0xf]
    %v504 = vld [vmem:[#allocation10 + $0x40] sm:$0xf]
    %v505 = vld [vmem:[#allocation10 + $0x44] sm:$0xf]
    %v506 = vld [vmem:[#allocation10 + $0x48] sm:$0xf]
    %v507 = vld [vmem:[#allocation10 + $0x4c] sm:$0xf]
    %v508 = vld [vmem:[#allocation10 + $0x50] sm:$0xf]
    %v509 = vld [vmem:[#allocation10 + $0x54] sm:$0xf]
    %v510 = vld [vmem:[#allocation10 + $0x58] sm:$0xf]
    %v511 = vld [vmem:[#allocation10 + $0x5c] sm:$0xf]
    %v512 = vld [vmem:[#allocation10 + $0x60] sm:$0xf]
    %v513 = vld [vmem:[#allocation10 + $0x64] sm:$0xf]
    %v514 = vld [vmem:[#allocation10 + $0x68] sm:$0xf]
    %v515 = vld [vmem:[#allocation10 + $0x6c] sm:$0xf]
    %v516 = vld [vmem:[#allocation10 + $0x70] sm:$0xf]
    %v517 = vld [vmem:[#allocation10 + $0x74] sm:$0xf]
    %v518 = vld [vmem:[#allocation10 + $0x78] sm:$0xf]
    %v519 = vld [vmem:[#allocation10 + $0x7c] sm:$0xf]
    %v520 = vld [vmem:[%s6] sm:$0x1]
    %v522 = vperm.slane %v520, 0
    %v556 = vunpack.c.l.b16 %v488
    %v557 = vunpack.c.l.b16 %v489
    %v558 = vunpack.c.l.b16 %v490
    %v559 = vunpack.c.l.b16 %v491
    %v560 = vunpack.c.l.b16 %v492
    %v561 = vunpack.c.l.b16 %v493
    %v562 = vunpack.c.l.b16 %v494
    %v563 = vunpack.c.l.b16 %v495
    %v564 = vunpack.c.l.b16 %v496
    %v565 = vunpack.c.l.b16 %v497
    %v566 = vunpack.c.l.b16 %v498
    %v567 = vunpack.c.l.b16 %v499
    %v568 = vunpack.c.l.b16 %v500
    %v569 = vunpack.c.l.b16 %v501
    %v570 = vunpack.c.l.b16 %v502
    %v571 = vunpack.c.l.b16 %v503
    %v572 = vunpack.c.l.b16 %v504
    %v573 = vunpack.c.l.b16 %v505
    %v574 = vunpack.c.l.b16 %v506
    %v575 = vunpack.c.l.b16 %v507
    %v576 = vunpack.c.l.b16 %v508
    %v577 = vunpack.c.l.b16 %v509
    %v578 = vunpack.c.l.b16 %v510
    %v579 = vunpack.c.l.b16 %v511
    %v580 = vunpack.c.l.b16 %v512
    %v581 = vunpack.c.l.b16 %v513
    %v582 = vunpack.c.l.b16 %v514
    %v583 = vunpack.c.l.b16 %v515
    %v584 = vunpack.c.l.b16 %v516
    %v585 = vunpack.c.l.b16 %v517
    %v586 = vunpack.c.l.b16 %v518
    %v587 = vunpack.c.l.b16 %v519
    %v588 = vpack.c.b16 %v557, %v556
    %v589 = vpack.c.b16 %v559, %v558
    %v590 = vpack.c.b16 %v561, %v560
    %v591 = vpack.c.b16 %v563, %v562
    %v592 = vpack.c.b16 %v565, %v564
    %v593 = vpack.c.b16 %v567, %v566
    %v594 = vpack.c.b16 %v569, %v568
    %v595 = vpack.c.b16 %v571, %v570
    %v596 = vpack.c.b16 %v573, %v572
    %v597 = vpack.c.b16 %v575, %v574
    %v598 = vpack.c.b16 %v577, %v576
    %v599 = vpack.c.b16 %v579, %v578
    %v600 = vpack.c.b16 %v581, %v580
    %v601 = vpack.c.b16 %v583, %v582
    %v602 = vpack.c.b16 %v585, %v584
    %v603 = vpack.c.b16 %v587, %v586
    %620 = vmatpush.bf16.msra.mxu0 %v595
    %621 = vmatpush.bf16.msra.mxu0 %v594
    %622 = vmatpush.bf16.msra.mxu0 %v593
    %623 = vmatpush.bf16.msra.mxu0 %v592
    %624 = vmatpush.bf16.msra.mxu0 %v591
    %625 = vmatpush.bf16.msra.mxu0 %v590
    %626 = vmatpush.bf16.msra.mxu0 %v589
    %627 = vmatpush.bf16.msra.mxu0 %v588
    %628 = vmatmul.bf16.gmra.mxu0 %v486
    %v629 = vpop.f32.mrf.mxu0
    %v630 = vadd.f32 %v522, %v629
    %v631 = vpop.f32.mrf.mxu0
    %632 = vdwg.mxu0
    %633 = vmatpush.bf16.msra.mxu0 %v603
    %634 = vmatpush.bf16.msra.mxu0 %v602
    %635 = vmatpush.bf16.msra.mxu0 %v601
    %636 = vmatpush.bf16.msra.mxu0 %v600
    %637 = vmatpush.bf16.msra.mxu0 %v599
    %638 = vmatpush.bf16.msra.mxu0 %v598
    %639 = vmatpush.bf16.msra.mxu0 %v597
    %640 = vmatpush.bf16.msra.mxu0 %v596
    %641 = vmatmul.bf16.gmra.mxu0 %v487
    %v642 = vpop.f32.mrf.mxu0
    %v643 = vadd.f32 %v630, %v642
    %v644 = vpop.f32.mrf.mxu0
    %645 = vdwg.mxu0
    %646 = vst [vmem:[#allocation11] sm:$0xff] %v643
    // Predicated region
    $region50: #{tpu_custom_call.1} parent=1 // pred_check
      _
    $region51: #{tpu_custom_call.1} parent=1 // pred_check_branch
      %648 = sbr.rel (0) target = $region53
    $region52: #{tpu_custom_call.1} parent=1 // pred_region
      %650 = vsyncadd [#allocation4], 0
      %s652 = sshll.u32 [#allocation11], 4
      %s653 = int_to_ptr.vmem [resolvable:$true] %s652
      %s654 = sshll.u32 %s7, 4
      %s655 = int_to_ptr.hbm [resolvable:$true] %s654
      %657 = dma.vmem_to_hbm [thread:$0]  %s653, 128, %s655, [#allocation4]
    $region53: #{tpu_custom_call.1} parent=1 // pred_fallthru
      _
    // Predicated region
    $region54: #{tpu_custom_call.1} parent=1 // pred_check
      _
    $region55: #{tpu_custom_call.1} parent=1 // pred_check_branch
      %659 = sbr.rel (0) target = $region57
    $region56: #{tpu_custom_call.1} parent=1 // pred_region
      %661 = dma.done [#allocation4], 128
    $region57: #{tpu_custom_call.1} parent=1 // pred_fallthru
      _
    %662 = vsyncpa [#allocation3], 1
    %663 = vsyncpa [#allocation6], 1
    %664 = vsyncpa [#allocation9], 1
    %665 = vsyncpa [#allocation4], 1

</llo_original>
